<compile_context>
chip_gen: v7x
topology: tpu7x:2x2x1
jax: 0.10.0
libtpu: 0.0.40
codegen_flags: <defaults>
</compile_context>

<pallas_src>
import jax
import jax.numpy as jnp
from jax.experimental import pallas as pl
from jax.experimental.pallas import tpu as pltpu

_LANE = 128       # vreg lane width (last dim)
_SUBLANE = 8      # vreg sublane count (second-to-last dim)
_MIB = 1024 * 1024


def _round_up(x, m):
    return ((x + m - 1) // m) * m


def _gelu_exact(x):
    # fairseq/unimol "gelu" == torch.nn.functional.gelu (exact erf form).
    return 0.5 * x * (1.0 + jax.lax.erf(x / jnp.sqrt(2.0).astype(x.dtype)))


# --------------------------- device heuristics ------------------------------

def _device_kind():
    try:
        return jax.devices()[0].device_kind.lower()
    except Exception:
        return ""


def _tensorcores_per_chip():
    # v7x exposes 2 TensorCores per chip to a Pallas "parallel" grid axis.
    return 2 if "v7" in _device_kind() else 1


def _bf16_vector_units():
    # v6e / v7x have bf16 VPU + EUP; v5e (and older) do not -> keep f32 GELU there.
    kind = _device_kind()
    if not kind:
        return False
    return not any(tag in kind for tag in ("v2", "v3", "v4", "v5"))


def _vmem_cap_bytes():
    # v7x: 64 MiB physical per TC -> stay well below.  v5e/v6e: 128 MiB physical.
    return 56 * _MIB if "v7" in _device_kind() else 100 * _MIB


def _vmem_estimate(tm, d_in_p, hidden_p, d_out_p, x_bytes, w_bytes, out_bytes,
                   weight_bufs):
    """Rough VMEM working-set estimate for one grid step."""
    weights = weight_bufs * (d_in_p * hidden_p + hidden_p * d_out_p) * w_bytes
    biases = weight_bufs * (hidden_p + d_out_p) * 4
    x_tiles = 2 * tm * d_in_p * x_bytes          # double-buffered input tile
    o_tiles = 2 * tm * d_out_p * out_bytes       # double-buffered output tile
    inter = 2 * tm * hidden_p * 4                # f32 h + gelu temporaries (rough)
    return weights + biases + x_tiles + o_tiles + inter


# ------------------------------- kernel -------------------------------------

def _make_kernel(gelu_dtype):
    def kernel(x_ref, w1_ref, b1_ref, w2_ref, b2_ref, o_ref):
        # Cast the activation tile on-core (VPU work overlapped with the MXU)
        # instead of paying a wrapper-side HBM pass for the cast.
        x = x_ref[...].astype(w1_ref.dtype)
        # Linear1: [tm, D_in_p] @ [D_in_p, H_p] -> f32 accumulator
        h = jnp.dot(x, w1_ref[...], preferred_element_type=jnp.float32)
        h = h + b1_ref[...]                         # bias in f32
        # GELU in bf16 on v6e/v7x (h is downcast for matmul 2 anyway), f32 on v5e.
        h = _gelu_exact(h.astype(gelu_dtype))
        # Linear2: [tm, H_p] @ [H_p, D_out_p] -> f32 accumulator
        y = jnp.dot(h.astype(w2_ref.dtype), w2_ref[...],
                    preferred_element_type=jnp.float32)
        y = y + b2_ref[...]                         # bias in f32
        o_ref[...] = y.astype(o_ref.dtype)
    return kernel


# --------------------------- parameter prep ----------------------------------

def prepare_nonlinear_head_params(w1, b1, w2, b2, *, compute_dtype=jnp.bfloat16):
    """One-time parameter prep: transpose, lane-pad to multiples of 128, cast.

    w1: [hidden, d_in]  b1: [hidden]   (torch nn.Linear layout)
    w2: [d_out, hidden] b2: [d_out]
    """
    hidden, d_in = w1.shape
    d_out = w2.shape[0]
    d_in_p = _round_up(d_in, _LANE)
    hidden_p = _round_up(hidden, _LANE)
    d_out_p = _round_up(d_out, _LANE)

    # Zero-padding is exact: padded x columns are 0, gelu(0 + 0) == 0, and the
    # padded output columns are sliced off after the kernel.
    w1_t = jnp.pad(jnp.transpose(w1).astype(compute_dtype),
                   ((0, d_in_p - d_in), (0, hidden_p - hidden)))
    w2_t = jnp.pad(jnp.transpose(w2).astype(compute_dtype),
                   ((0, hidden_p - hidden), (0, d_out_p - d_out)))
    b1_p = jnp.pad(b1.astype(jnp.float32), (0, hidden_p - hidden)).reshape(1, hidden_p)
    b2_p = jnp.pad(b2.astype(jnp.float32), (0, d_out_p - d_out)).reshape(1, d_out_p)

    return dict(
        w1_t=w1_t, b1=b1_p, w2_t=w2_t, b2=b2_p,
        d_in=d_in, hidden=hidden, d_out=d_out,
        d_in_p=d_in_p, hidden_p=hidden_p, d_out_p=d_out_p,
        compute_dtype=compute_dtype,
    )


# ------------------------------ pallas_call ----------------------------------

def _call(x_p, params, *, tm, m_pad, out_dtype, gelu_dtype,
          single_buffer_weights, vmem_limit_bytes):
    d_in_p = params["d_in_p"]
    hidden_p = params["hidden_p"]
    d_out_p = params["d_out_p"]
    grid_m = m_pad // tm

    # Resident operands (constant index_map) don't need double-buffering.
    resident_kw = ({"pipeline_mode": pl.Buffered(1)}
                   if single_buffer_weights else {})

    grid_spec = pltpu.PrefetchScalarGridSpec(
        num_scalar_prefetch=0,
        grid=(grid_m,),
        in_specs=[
            pl.BlockSpec((tm, d_in_p), lambda i: (i, 0)),                       # x tile
            pl.BlockSpec((d_in_p, hidden_p), lambda i: (0, 0), **resident_kw),  # W1^T
            pl.BlockSpec((1, hidden_p), lambda i: (0, 0), **resident_kw),       # b1 (f32)
            pl.BlockSpec((hidden_p, d_out_p), lambda i: (0, 0), **resident_kw), # W2^T
            pl.BlockSpec((1, d_out_p), lambda i: (0, 0), **resident_kw),        # b2 (f32)
        ],
        out_specs=pl.BlockSpec((tm, d_out_p), lambda i: (i, 0)),
    )

    fn = pl.pallas_call(
        _make_kernel(gelu_dtype),
        out_shape=jax.ShapeDtypeStruct((m_pad, d_out_p), out_dtype),
        grid_spec=grid_spec,
        compiler_params=pltpu.CompilerParams(
            dimension_semantics=("parallel",),        # row tiles are independent
            vmem_limit_bytes=vmem_limit_bytes),
    )
    return fn(x_p, params["w1_t"], params["b1"], params["w2_t"], params["b2"])


def nonlinear_head(x, params, *, tm=2048):
    """x: [..., d_in] -> [..., d_out] using pre-prepared params."""
    d_in = params["d_in"]
    d_out = params["d_out"]
    d_in_p = params["d_in_p"]
    hidden_p = params["hidden_p"]
    d_out_p = params["d_out_p"]
    compute_dtype = params["compute_dtype"]

    orig_shape = x.shape
    assert orig_shape[-1] == d_in, "feature dim mismatch"
    x2d = x.reshape(-1, d_in)
    M = x2d.shape[0]

    # ---- row tile selection -------------------------------------------------
    # Large tm amortizes the ~0.35us per-step overhead; clamp to problem size.
    tm = max(_SUBLANE, min(_round_up(tm, _SUBLANE), _round_up(M, _SUBLANE)))
    # On 2-TC chips (v7x) keep grid_m >= 2 so both TensorCores get work.
    if _tensorcores_per_chip() >= 2 and M > _SUBLANE:
        tm = min(tm, _round_up(pl.cdiv(M, 2), _SUBLANE))
    # Shrink tm until the estimated working set fits the per-generation budget.
    cap = _vmem_cap_bytes()
    x_bytes = jnp.dtype(x.dtype).itemsize
    w_bytes = jnp.dtype(compute_dtype).itemsize
    out_bytes = jnp.dtype(x.dtype).itemsize
    while (tm > 4 * _SUBLANE and
           _vmem_estimate(tm, d_in_p, hidden_p, d_out_p,
                          x_bytes, w_bytes, out_bytes, 1) > int(0.8 * cap)):
        tm = _round_up(tm // 2, _SUBLANE)
    m_pad = _round_up(M, tm)

    est = _vmem_estimate(tm, d_in_p, hidden_p, d_out_p,
                         x_bytes, w_bytes, out_bytes, 2)
    vmem_limit = min(cap, max(32 * _MIB, 2 * est))

    # ---- activation padding: only when actually needed, no wrapper-side cast --
    pad_rows, pad_cols = m_pad - M, d_in_p - d_in
    if pad_rows or pad_cols:
        x_p = jnp.pad(x2d, ((0, pad_rows), (0, pad_cols)))
    else:
        x_p = x2d                     # zero extra HBM passes over x

    # GELU dtype: bf16 on chips with bf16 VPU/EUP when compute dtype is bf16.
    gelu_dtype = (compute_dtype
                  if (jnp.dtype(compute_dtype) != jnp.dtype(jnp.float32)
                      and _bf16_vector_units())
                  else jnp.float32)

    common = dict(tm=tm, m_pad=m_pad, out_dtype=x.dtype)
    try:
        out = _call(x_p, params, gelu_dtype=gelu_dtype,
                    single_buffer_weights=True,
                    vmem_limit_bytes=vmem_limit, **common)
        out = jax.block_until_ready(out)
    except Exception:
        # Conservative fallback: default double-buffering, f32 GELU, full budget.
        out = _call(x_p, params, gelu_dtype=jnp.float32,
                    single_buffer_weights=False,
                    vmem_limit_bytes=cap, **common)
        out = jax.block_until_ready(out)

    # Skip the post-kernel copy when the kernel output is already exact-shaped.
    if m_pad == M and d_out_p == d_out:
        y = out
    else:
        y = out[:M, :d_out]
    return y.reshape(*orig_shape[:-1], d_out)


# ------------------------------ reference ------------------------------------

def _reference(x, w1, b1, w2, b2):
    h = x @ w1.T + b1
    h = 0.5 * h * (1.0 + jax.lax.erf(h / jnp.sqrt(2.0)))
    return h @ w2.T + b2


if __name__ == "__main__":
    # Small shapes consistent with the module: batch=2, seq=8, input_dim=32,
    # hidden defaults to input_dim, out_dim=16.
    batch, seq = 2, 8
    input_dim, hidden, out_dim = 32, 32, 16

    key = jax.random.PRNGKey(0)
    k_x, k_w1, k_b1, k_w2, k_b2 = jax.random.split(key, 5)

    x = jax.random.normal(k_x, (batch, seq, input_dim), dtype=jnp.float32)
    # Deterministic nn.Linear-style params (synthetic, not loaded).
    w1 = jax.random.uniform(k_w1, (hidden, input_dim), jnp.float32,
                            -1.0 / jnp.sqrt(input_dim), 1.0 / jnp.sqrt(input_dim))
    b1 = jax.random.uniform(k_b1, (hidden,), jnp.float32,
                            -1.0 / jnp.sqrt(input_dim), 1.0 / jnp.sqrt(input_dim))
    w2 = jax.random.uniform(k_w2, (out_dim, hidden), jnp.float32,
                            -1.0 / jnp.sqrt(hidden), 1.0 / jnp.sqrt(hidden))
    b2 = jax.random.uniform(k_b2, (out_dim,), jnp.float32,
                            -1.0 / jnp.sqrt(hidden), 1.0 / jnp.sqrt(hidden))

    y_ref = _reference(x.reshape(-1, input_dim), w1, b1, w2, b2).reshape(
        batch, seq, out_dim)

    # --- f32 compute path (strict check, f32 GELU) ---
    params_f32 = prepare_nonlinear_head_params(w1, b1, w2, b2,
                                               compute_dtype=jnp.float32)
    y_f32 = nonlinear_head(x, params_f32)
    jax.block_until_ready(y_f32)
    assert jnp.allclose(y_f32, y_ref, atol=1e-5, rtol=1e-5), "f32 mismatch vs reference"

    # --- bf16 compute path (MXU fast path; f32 accumulation) ---
    params_bf16 = prepare_nonlinear_head_params(w1, b1, w2, b2,
                                                compute_dtype=jnp.bfloat16)
    y_bf16 = nonlinear_head(x, params_bf16)
    jax.block_until_ready(y_bf16)
    assert jnp.allclose(y_bf16, y_ref, atol=5e-2, rtol=5e-2), "bf16 mismatch vs reference"

    print("KERNEL_OK")
</pallas_src>

<mosaic_0001>
module attributes {stable_mosaic.version = 11 : i64} {
  func.func @kernel(%arg0: i32, %arg1: memref<16x128xf32, #tpu.memory_space<vmem>>, %arg2: memref<128x128xf32, #tpu.memory_space<vmem>>, %arg3: memref<1x128xf32, #tpu.memory_space<vmem>>, %arg4: memref<128x128xf32, #tpu.memory_space<vmem>>, %arg5: memref<1x128xf32, #tpu.memory_space<vmem>>, %arg6: memref<16x128xf32, #tpu.memory_space<vmem>>) attributes {dimension_semantics = [#tpu.dimension_semantics<parallel>], iteration_bounds = array<i64: 1>, scalar_prefetch = 0 : i64, scratch_operands = 0 : i64, tpu.core_type = #tpu.core_type<tc>, window_params = [{transform_indices = @transform_0, window_bounds = array<i64: 16, 128>}, {pipeline_mode = #tpu.pipeline_mode<synchronous>, transform_indices = @transform_1, window_bounds = array<i64: 128, 128>}, {pipeline_mode = #tpu.pipeline_mode<synchronous>, transform_indices = @transform_2, window_bounds = array<i64: 1, 128>}, {pipeline_mode = #tpu.pipeline_mode<synchronous>, transform_indices = @transform_3, window_bounds = array<i64: 128, 128>}, {pipeline_mode = #tpu.pipeline_mode<synchronous>, transform_indices = @transform_4, window_bounds = array<i64: 1, 128>}, {transform_indices = @transform_5, window_bounds = array<i64: 16, 128>}]} {
    %c0 = arith.constant 0 : index
    %c0_0 = arith.constant 0 : index
    %0 = vector.load %arg1[%c0, %c0_0] : memref<16x128xf32, #tpu.memory_space<vmem>>, vector<16x128xf32>
    %c0_1 = arith.constant 0 : index
    %c0_2 = arith.constant 0 : index
    %1 = vector.load %arg2[%c0_1, %c0_2] : memref<128x128xf32, #tpu.memory_space<vmem>>, vector<128x128xf32>
    %cst = arith.constant dense<0.000000e+00> : vector<16x128xf32>
    %2 = tpu.matmul %0, %1, %cst {dimension_numbers = #tpu.dot_dimension_numbers<[1], [0], [0], [1], [0, 0, 1, 1], [], []>} : vector<16x128xf32>, vector<128x128xf32>, vector<16x128xf32> -> vector<16x128xf32>
    %c0_3 = arith.constant 0 : index
    %c0_4 = arith.constant 0 : index
    %3 = vector.load %arg3[%c0_3, %c0_4] : memref<1x128xf32, #tpu.memory_space<vmem>>, vector<1x128xf32>
    %4 = vector.broadcast %3 : vector<1x128xf32> to vector<16x128xf32>
    %5 = arith.addf %2, %4 : vector<16x128xf32>
    %cst_5 = arith.constant 5.000000e-01 : f32
    %6 = vector.broadcast %cst_5 : f32 to vector<16x128xf32>
    %7 = arith.mulf %6, %5 : vector<16x128xf32>
    %cst_6 = arith.constant 2.000000e+00 : f32
    %8 = math.sqrt %cst_6 : f32
    %9 = vector.broadcast %8 : f32 to vector<16x128xf32>
    %10 = arith.divf %5, %9 : vector<16x128xf32>
    %11 = math.erf %10 : vector<16x128xf32>
    %cst_7 = arith.constant 1.000000e+00 : f32
    %12 = vector.broadcast %cst_7 : f32 to vector<16x128xf32>
    %13 = arith.addf %12, %11 : vector<16x128xf32>
    %14 = arith.mulf %7, %13 : vector<16x128xf32>
    %c0_8 = arith.constant 0 : index
    %c0_9 = arith.constant 0 : index
    %15 = vector.load %arg4[%c0_8, %c0_9] : memref<128x128xf32, #tpu.memory_space<vmem>>, vector<128x128xf32>
    %cst_10 = arith.constant dense<0.000000e+00> : vector<16x128xf32>
    %16 = tpu.matmul %14, %15, %cst_10 {dimension_numbers = #tpu.dot_dimension_numbers<[1], [0], [0], [1], [0, 0, 1, 1], [], []>} : vector<16x128xf32>, vector<128x128xf32>, vector<16x128xf32> -> vector<16x128xf32>
    %c0_11 = arith.constant 0 : index
    %c0_12 = arith.constant 0 : index
    %17 = vector.load %arg5[%c0_11, %c0_12] : memref<1x128xf32, #tpu.memory_space<vmem>>, vector<1x128xf32>
    %18 = vector.broadcast %17 : vector<1x128xf32> to vector<16x128xf32>
    %19 = arith.addf %16, %18 : vector<16x128xf32>
    %c0_13 = arith.constant 0 : index
    %c0_14 = arith.constant 0 : index
    %20 = vector.load %arg6[%c0_13, %c0_14] : memref<16x128xf32, #tpu.memory_space<vmem>>, vector<16x128xf32>
    tpu.vector_store %arg6[%c0_13, %c0_14], %19 {strides = array<i32>} : memref<16x128xf32, #tpu.memory_space<vmem>>, vector<16x128xf32>,
    return
  }
  func.func @transform_0(%arg0: i32) -> (i32, i32) {
    %c0_i32 = arith.constant 0 : i32
    %c0_i32_0 = arith.constant 0 : i32
    return %arg0, %c0_i32 : i32, i32
  }
  func.func @transform_1(%arg0: i32) -> (i32, i32) {
    %c0_i32 = arith.constant 0 : i32
    %c0_i32_0 = arith.constant 0 : i32
    %c0_i32_1 = arith.constant 0 : i32
    return %c0_i32, %c0_i32_0 : i32, i32
  }
  func.func @transform_2(%arg0: i32) -> (i32, i32) {
    %c0_i32 = arith.constant 0 : i32
    %c0_i32_0 = arith.constant 0 : i32
    %c0_i32_1 = arith.constant 0 : i32
    return %c0_i32, %c0_i32_0 : i32, i32
  }
  func.func @transform_3(%arg0: i32) -> (i32, i32) {
    %c0_i32 = arith.constant 0 : i32
    %c0_i32_0 = arith.constant 0 : i32
    %c0_i32_1 = arith.constant 0 : i32
    return %c0_i32, %c0_i32_0 : i32, i32
  }
  func.func @transform_4(%arg0: i32) -> (i32, i32) {
    %c0_i32 = arith.constant 0 : i32
    %c0_i32_0 = arith.constant 0 : i32
    %c0_i32_1 = arith.constant 0 : i32
    return %c0_i32, %c0_i32_0 : i32, i32
  }
  func.func @transform_5(%arg0: i32) -> (i32, i32) {
    %c0_i32 = arith.constant 0 : i32
    %c0_i32_0 = arith.constant 0 : i32
    return %arg0, %c0_i32 : i32, i32
  }
}

module attributes {stable_mosaic.version = 11 : i64} {
  func.func @kernel(%arg0: i32, %arg1: memref<16x128xf32, #tpu.memory_space<vmem>>, %arg2: memref<128x128xf32, #tpu.memory_space<vmem>>, %arg3: memref<1x128xf32, #tpu.memory_space<vmem>>, %arg4: memref<128x128xf32, #tpu.memory_space<vmem>>, %arg5: memref<1x128xf32, #tpu.memory_space<vmem>>, %arg6: memref<16x128xf32, #tpu.memory_space<vmem>>) attributes {dimension_semantics = [#tpu.dimension_semantics<parallel>], iteration_bounds = array<i64: 1>, scalar_prefetch = 0 : i64, scratch_operands = 0 : i64, tpu.core_type = #tpu.core_type<tc>, window_params = [{transform_indices = @transform_0, window_bounds = array<i64: 16, 128>}, {pipeline_mode = #tpu.pipeline_mode<synchronous>, transform_indices = @transform_1, window_bounds = array<i64: 128, 128>}, {pipeline_mode = #tpu.pipeline_mode<synchronous>, transform_indices = @transform_2, window_bounds = array<i64: 1, 128>}, {pipeline_mode = #tpu.pipeline_mode<synchronous>, transform_indices = @transform_3, window_bounds = array<i64: 128, 128>}, {pipeline_mode = #tpu.pipeline_mode<synchronous>, transform_indices = @transform_4, window_bounds = array<i64: 1, 128>}, {transform_indices = @transform_5, window_bounds = array<i64: 16, 128>}]} {
    %c0 = arith.constant 0 : index
    %c0_0 = arith.constant 0 : index
    %0 = vector.load %arg1[%c0, %c0_0] : memref<16x128xf32, #tpu.memory_space<vmem>>, vector<16x128xf32>
    %c0_1 = arith.constant 0 : index
    %c0_2 = arith.constant 0 : index
    %1 = vector.load %arg2[%c0_1, %c0_2] : memref<128x128xf32, #tpu.memory_space<vmem>>, vector<128x128xf32>
    %cst = arith.constant dense<0.000000e+00> : vector<16x128xf32>
    %2 = tpu.matmul %0, %1, %cst {dimension_numbers = #tpu.dot_dimension_numbers<[1], [0], [0], [1], [0, 0, 1, 1], [], []>} : vector<16x128xf32>, vector<128x128xf32>, vector<16x128xf32> -> vector<16x128xf32>
    %c0_3 = arith.constant 0 : index
    %c0_4 = arith.constant 0 : index
    %3 = vector.load %arg3[%c0_3, %c0_4] : memref<1x128xf32, #tpu.memory_space<vmem>>, vector<1x128xf32>
    %4 = vector.broadcast %3 : vector<1x128xf32> to vector<16x128xf32>
    %5 = arith.addf %2, %4 : vector<16x128xf32>
    %cst_5 = arith.constant 5.000000e-01 : f32
    %6 = vector.broadcast %cst_5 : f32 to vector<16x128xf32>
    %7 = arith.mulf %6, %5 : vector<16x128xf32>
    %cst_6 = arith.constant 2.000000e+00 : f32
    %8 = math.sqrt %cst_6 : f32
    %9 = vector.broadcast %8 : f32 to vector<16x128xf32>
    %10 = arith.divf %5, %9 : vector<16x128xf32>
    %11 = math.erf %10 : vector<16x128xf32>
    %cst_7 = arith.constant 1.000000e+00 : f32
    %12 = vector.broadcast %cst_7 : f32 to vector<16x128xf32>
    %13 = arith.addf %12, %11 : vector<16x128xf32>
    %14 = arith.mulf %7, %13 : vector<16x128xf32>
    %c0_8 = arith.constant 0 : index
    %c0_9 = arith.constant 0 : index
    %15 = vector.load %arg4[%c0_8, %c0_9] : memref<128x128xf32, #tpu.memory_space<vmem>>, vector<128x128xf32>
    %cst_10 = arith.constant dense<0.000000e+00> : vector<16x128xf32>
    %16 = tpu.matmul %14, %15, %cst_10 {dimension_numbers = #tpu.dot_dimension_numbers<[1], [0], [0], [1], [0, 0, 1, 1], [], []>} : vector<16x128xf32>, vector<128x128xf32>, vector<16x128xf32> -> vector<16x128xf32>
    %c0_11 = arith.constant 0 : index
    %c0_12 = arith.constant 0 : index
    %17 = vector.load %arg5[%c0_11, %c0_12] : memref<1x128xf32, #tpu.memory_space<vmem>>, vector<1x128xf32>
    %18 = vector.broadcast %17 : vector<1x128xf32> to vector<16x128xf32>
    %19 = arith.addf %16, %18 : vector<16x128xf32>
    %c0_13 = arith.constant 0 : index
    %c0_14 = arith.constant 0 : index
    %20 = vector.load %arg6[%c0_13, %c0_14] : memref<16x128xf32, #tpu.memory_space<vmem>>, vector<16x128xf32>
    tpu.vector_store %arg6[%c0_13, %c0_14], %19 {strides = array<i32>} : memref<16x128xf32, #tpu.memory_space<vmem>>, vector<16x128xf32>,
    return
  }
  func.func @transform_0(%arg0: i32) -> (i32, i32) {
    %c0_i32 = arith.constant 0 : i32
    %c0_i32_0 = arith.constant 0 : i32
    return %arg0, %c0_i32 : i32, i32
  }
  func.func @transform_1(%arg0: i32) -> (i32, i32) {
    %c0_i32 = arith.constant 0 : i32
    %c0_i32_0 = arith.constant 0 : i32
    %c0_i32_1 = arith.constant 0 : i32
    return %c0_i32, %c0_i32_0 : i32, i32
  }
  func.func @transform_2(%arg0: i32) -> (i32, i32) {
    %c0_i32 = arith.constant 0 : i32
    %c0_i32_0 = arith.constant 0 : i32
    %c0_i32_1 = arith.constant 0 : i32
    return %c0_i32, %c0_i32_0 : i32, i32
  }
  func.func @transform_3(%arg0: i32) -> (i32, i32) {
    %c0_i32 = arith.constant 0 : i32
    %c0_i32_0 = arith.constant 0 : i32
    %c0_i32_1 = arith.constant 0 : i32
    return %c0_i32, %c0_i32_0 : i32, i32
  }
  func.func @transform_4(%arg0: i32) -> (i32, i32) {
    %c0_i32 = arith.constant 0 : i32
    %c0_i32_0 = arith.constant 0 : i32
    %c0_i32_1 = arith.constant 0 : i32
    return %c0_i32, %c0_i32_0 : i32, i32
  }
  func.func @transform_5(%arg0: i32) -> (i32, i32) {
    %c0_i32 = arith.constant 0 : i32
    %c0_i32_0 = arith.constant 0 : i32
    return %arg0, %c0_i32 : i32, i32
  }
}

</mosaic_0001>

<llo_original>
// kernel: tpu_custom_call.1
$region0: #{tpu_custom_call.1}
  #allocation0 [shape = 'u32[]', space=smem, size = 0x4, offset = 0x4, fixed_abs, tag = 'smem constant byte address 0x4 - core index']
  #allocation1 [shape = 'u32[144,128]{1,0:T(1,128)}', space=vmem, size = 0x12000, scoped, tag = 'internal scratch']
  %s0 = inlined_call_operand.hbm [shape: f32[16,128], index: 0, kind: input, shape index: {}]
  %s1 = inlined_call_operand.hbm [shape: f32[128,128], index: 1, kind: input, shape index: {}]
  %s2 = inlined_call_operand.vmem [shape: f32[1,128], index: 2, kind: input, shape index: {}]
  %s3 = inlined_call_operand.hbm [shape: f32[128,128], index: 3, kind: input, shape index: {}]
  %s4 = inlined_call_operand.vmem [shape: f32[1,128], index: 4, kind: input, shape index: {}]
  %s5 = inlined_call_operand.hbm [shape: f32[16,128], index: 5, kind: output, shape index: {}]
  %s6 = sld [smem:[#allocation0]]
  $region42: #{tpu_custom_call.1} parent=0
    _
  %s8 = ssub.s32 1, %s6
  %s9 = scalar_select 0, %s8, %s6
  $region1: #{tpu_custom_call.1} parent=0
    #allocation2 [shape = 'u8[8192]{0}', space=vmem, size = 0x2000, scoped, tag = 'input window, operand 0, single buffered']
    #allocation3 [shape = 's32[1]{0}', space=sflag, size = 0x4, scoped, tag = 'scoped memory for tpu_custom_call.1']
    #allocation4 [shape = 's32[1]{0}', space=sflag, size = 0x4, scoped, tag = 'scoped memory for tpu_custom_call.1']
    #allocation5 [shape = 'u8[65536]{0}', space=vmem, size = 0x10000, scoped, tag = 'input window, operand 1, single buffered']
    #allocation6 [shape = 's32[1]{0}', space=sflag, size = 0x4, scoped, tag = 'scoped memory for tpu_custom_call.1']
    #allocation7 [shape = 'u8[65536]{0}', space=vmem, size = 0x10000, scoped, tag = 'input window, operand 3, single buffered']
    #allocation8 [shape = 'u8[8192]{0}', space=vmem, size = 0x2000, scoped, tag = 'output window, operand 0, single buffered']
    %10 = vsyncpa [#allocation3], 0
    %11 = vsyncpa [#allocation6], 0
    %12 = vsyncpa [#allocation4], 0
    // Predicated region
    $region2: #{tpu_custom_call.1} parent=1 // pred_check
      _
    $region3: #{tpu_custom_call.1} parent=1 // pred_check_branch
      %14 = sbr.rel (0) target = $region5
    $region4: #{tpu_custom_call.1} parent=1 // pred_region
      %s16 = ssub.s32 256, 256
      %17 = vsyncadd [#allocation3], %s16
      %s18 = sshll.u32 [#allocation2], 4
      %s19 = int_to_ptr.vmem [resolvable:$true] %s18
      %24 = dma.hbm_to_vmem [thread:$0]  %s0, 256, %s19, [#allocation3], 128, 128, 8
    $region5: #{tpu_custom_call.1} parent=1 // pred_fallthru
      _
    // Predicated region
    $region6: #{tpu_custom_call.1} parent=1 // pred_check
      _
    $region7: #{tpu_custom_call.1} parent=1 // pred_check_branch
      %26 = sbr.rel (0) target = $region9
    $region8: #{tpu_custom_call.1} parent=1 // pred_region
      %s28 = ssub.s32 2048, 2048
      %29 = vsyncadd [#allocation6], %s28
      %s30 = sshll.u32 [#allocation5], 4
      %s31 = int_to_ptr.vmem [resolvable:$true] %s30
      %36 = dma.hbm_to_vmem [thread:$0]  %s1, 2048, %s31, [#allocation6], 128, 128, 8
    $region9: #{tpu_custom_call.1} parent=1 // pred_fallthru
      _
    // Predicated region
    $region10: #{tpu_custom_call.1} parent=1 // pred_check
      _
    $region11: #{tpu_custom_call.1} parent=1 // pred_check_branch
      %38 = sbr.rel (0) target = $region13
    $region12: #{tpu_custom_call.1} parent=1 // pred_region
      _
    $region13: #{tpu_custom_call.1} parent=1 // pred_fallthru
      _
    // Predicated region
    $region14: #{tpu_custom_call.1} parent=1 // pred_check
      _
    $region15: #{tpu_custom_call.1} parent=1 // pred_check_branch
      %40 = sbr.rel (0) target = $region17
    $region16: #{tpu_custom_call.1} parent=1 // pred_region
      %s42 = ssub.s32 2048, 2048
      %43 = vsyncadd [#allocation6], %s42
      %s44 = sshll.u32 [#allocation7], 4
      %s45 = int_to_ptr.vmem [resolvable:$true] %s44
      %50 = dma.hbm_to_vmem [thread:$0]  %s3, 2048, %s45, [#allocation6], 128, 128, 8
    $region17: #{tpu_custom_call.1} parent=1 // pred_fallthru
      _
    // Predicated region
    $region18: #{tpu_custom_call.1} parent=1 // pred_check
      _
    $region19: #{tpu_custom_call.1} parent=1 // pred_check_branch
      %52 = sbr.rel (0) target = $region21
    $region20: #{tpu_custom_call.1} parent=1 // pred_region
      _
    $region21: #{tpu_custom_call.1} parent=1 // pred_fallthru
      _
    // Predicated region
    $region22: #{tpu_custom_call.1} parent=1 // pred_check
      _
    $region23: #{tpu_custom_call.1} parent=1 // pred_check_branch
      %54 = sbr.rel (0) target = $region25
    $region24: #{tpu_custom_call.1} parent=1 // pred_region
      %55 = dma.done [#allocation3], 256
    $region25: #{tpu_custom_call.1} parent=1 // pred_fallthru
      _
    // Predicated region
    $region26: #{tpu_custom_call.1} parent=1 // pred_check
      _
    $region27: #{tpu_custom_call.1} parent=1 // pred_check_branch
      %57 = sbr.rel (0) target = $region29
    $region28: #{tpu_custom_call.1} parent=1 // pred_region
      %58 = dma.done [#allocation6], 2048
    $region29: #{tpu_custom_call.1} parent=1 // pred_fallthru
      _
    // Predicated region
    $region30: #{tpu_custom_call.1} parent=1 // pred_check
      _
    $region31: #{tpu_custom_call.1} parent=1 // pred_check_branch
      %60 = sbr.rel (0) target = $region33
    $region32: #{tpu_custom_call.1} parent=1 // pred_region
      %61 = dma.done [#allocation6], 2048
    $region33: #{tpu_custom_call.1} parent=1 // pred_fallthru
      _
    %v62 = vld [vmem:[#allocation2] sm:$0xff]
    %v63 = vld [vmem:[#allocation2 + $0x8] sm:$0xff]
    %v64 = vld [vmem:[#allocation5] sm:$0xff]
    %v65 = vld [vmem:[#allocation5 + $0x8] sm:$0xff]
    %v66 = vld [vmem:[#allocation5 + $0x10] sm:$0xff]
    %v67 = vld [vmem:[#allocation5 + $0x18] sm:$0xff]
    %v68 = vld [vmem:[#allocation5 + $0x20] sm:$0xff]
    %v69 = vld [vmem:[#allocation5 + $0x28] sm:$0xff]
    %v70 = vld [vmem:[#allocation5 + $0x30] sm:$0xff]
    %v71 = vld [vmem:[#allocation5 + $0x38] sm:$0xff]
    %v72 = vld [vmem:[#allocation5 + $0x40] sm:$0xff]
    %v73 = vld [vmem:[#allocation5 + $0x48] sm:$0xff]
    %v74 = vld [vmem:[#allocation5 + $0x50] sm:$0xff]
    %v75 = vld [vmem:[#allocation5 + $0x58] sm:$0xff]
    %v76 = vld [vmem:[#allocation5 + $0x60] sm:$0xff]
    %v77 = vld [vmem:[#allocation5 + $0x68] sm:$0xff]
    %v78 = vld [vmem:[#allocation5 + $0x70] sm:$0xff]
    %v79 = vld [vmem:[#allocation5 + $0x78] sm:$0xff]
    %v80 = vld [vmem:[%s2] sm:$0x1]
    %v82 = vlaneseq
    %v83 = vshrl.u32 %v82, 7
    %v84 = vsub.s32 0, %v83
    %v85 = vrot.slane %v80, %v84
    %87 = vmatprep.subr.mxu0 0.0
    %88 = vmatpush1.msra.mxu0 %v64
    %89 = vmatprep.subr.mxu0 0.0
    %90 = vmatpush1.msra.mxu0 %v65
    %91 = vmatprep.subr.mxu0 0.0
    %92 = vmatpush1.msra.mxu0 %v66
    %93 = vmatprep.subr.mxu0 0.0
    %94 = vmatpush1.msra.mxu0 %v67
    %95 = vmatprep.subr.mxu0 0.0
    %96 = vmatpush1.msra.mxu0 %v68
    %97 = vmatprep.subr.mxu0 0.0
    %98 = vmatpush1.msra.mxu0 %v69
    %99 = vmatprep.subr.mxu0 0.0
    %100 = vmatpush1.msra.mxu0 %v70
    %101 = vmatprep.subr.mxu0 0.0
    %102 = vmatpush1.msra.mxu0 %v71
    %103 = vmatprep.subr.mxu0 0.0
    %104 = vmatpush1.msra.mxu0 %v72
    %105 = vmatprep.subr.mxu0 0.0
    %106 = vmatpush1.msra.mxu0 %v73
    %107 = vmatprep.subr.mxu0 0.0
    %108 = vmatpush1.msra.mxu0 %v74
    %109 = vmatprep.subr.mxu0 0.0
    %110 = vmatpush1.msra.mxu0 %v75
    %111 = vmatprep.subr.mxu0 0.0
    %112 = vmatpush1.msra.mxu0 %v76
    %113 = vmatprep.subr.mxu0 0.0
    %114 = vmatpush1.msra.mxu0 %v77
    %115 = vmatprep.subr.mxu0 0.0
    %116 = vmatpush1.msra.mxu0 %v78
    %117 = vmatprep.subr.mxu0 0.0
    %118 = vmatpush1.msra.mxu0 %v79
    %119 = vmatprep.subr.mxu0 0.0
    %120 = vmatpush1.msra.mxu0 0.0
    %121 = vmatprep.subr.mxu0 0.0
    %122 = vmatpush1.msra.mxu0 0.0
    %123 = vmatprep.subr.mxu0 0.0
    %124 = vmatpush1.msra.mxu0 0.0
    %125 = vmatprep.subr.mxu0 0.0
    %126 = vmatpush1.msra.mxu0 0.0
    %127 = vmatprep.subr.mxu0 0.0
    %128 = vmatpush1.msra.mxu0 0.0
    %129 = vmatprep.subr.mxu0 0.0
    %130 = vmatpush1.msra.mxu0 0.0
    %131 = vmatprep.subr.mxu0 0.0
    %132 = vmatpush1.msra.mxu0 0.0
    %133 = vmatprep.subr.mxu0 0.0
    %134 = vmatpush1.msra.mxu0 0.0
    %135 = vmatprep.subr.mxu0 0.0
    %136 = vmatpush1.msra.mxu0 0.0
    %137 = vmatprep.subr.mxu0 0.0
    %138 = vmatpush1.msra.mxu0 0.0
    %139 = vmatprep.subr.mxu0 0.0
    %140 = vmatpush1.msra.mxu0 0.0
    %141 = vmatprep.subr.mxu0 0.0
    %142 = vmatpush1.msra.mxu0 0.0
    %143 = vmatprep.subr.mxu0 0.0
    %144 = vmatpush1.msra.mxu0 0.0
    %145 = vmatprep.subr.mxu0 0.0
    %146 = vmatpush1.msra.mxu0 0.0
    %147 = vmatprep.subr.mxu0 0.0
    %148 = vmatpush1.msra.mxu0 0.0
    %149 = vmatprep.subr.mxu0 0.0
    %150 = vmatpush1.msra.mxu0 0.0
    %151 = vmatprep.mubr.f32.mxu0 0.0
    %152 = vmatmul.mubr.f32.gmra.mrb[0].mxu0 %v62
    %v153 = vpop.f32.mrb[0].mxu0
    %v154 = vadd.f32 %v85, %v153
    %v155 = vpop.f32.mrb[0].mxu0
    %156 = vmatprep.mubr.f32.mxu0 0.0
    %157 = vmatmul.mubr.f32.gmra.mrb[0].mxu0 %v63
    %v158 = vpop.f32.mrb[0].mxu0
    %v159 = vadd.f32 %v85, %v158
    %v160 = vpop.f32.mrb[0].mxu0
    %161 = vdwg.mxu0
    %v162 = vmul.f32 %v154, 0.5
    %v163 = vmul.f32 %v159, 0.5
    %v164 = vrcp.pop 1.4142135
    %v165 = vmul.f32 %v154, %v164
    %v166 = vmul.f32 %v159, %v164
    %v167 = verf.f32.pop %v165
    %v168 = verf.f32.pop %v166
    %v169 = vadd.f32 %v167, 1.0
    %v170 = vadd.f32 %v168, 1.0
    %v171 = vmul.f32 %v162, %v169
    %v172 = vmul.f32 %v163, %v170
    %v173 = vld [vmem:[#allocation7] sm:$0xff]
    %v174 = vld [vmem:[#allocation7 + $0x8] sm:$0xff]
    %v175 = vld [vmem:[#allocation7 + $0x10] sm:$0xff]
    %v176 = vld [vmem:[#allocation7 + $0x18] sm:$0xff]
    %v177 = vld [vmem:[#allocation7 + $0x20] sm:$0xff]
    %v178 = vld [vmem:[#allocation7 + $0x28] sm:$0xff]
    %v179 = vld [vmem:[#allocation7 + $0x30] sm:$0xff]
    %v180 = vld [vmem:[#allocation7 + $0x38] sm:$0xff]
    %v181 = vld [vmem:[#allocation7 + $0x40] sm:$0xff]
    %v182 = vld [vmem:[#allocation7 + $0x48] sm:$0xff]
    %v183 = vld [vmem:[#allocation7 + $0x50] sm:$0xff]
    %v184 = vld [vmem:[#allocation7 + $0x58] sm:$0xff]
    %v185 = vld [vmem:[#allocation7 + $0x60] sm:$0xff]
    %v186 = vld [vmem:[#allocation7 + $0x68] sm:$0xff]
    %v187 = vld [vmem:[#allocation7 + $0x70] sm:$0xff]
    %v188 = vld [vmem:[#allocation7 + $0x78] sm:$0xff]
    %v189 = vld [vmem:[%s4] sm:$0x1]
    %v191 = vlaneseq
    %v192 = vshrl.u32 %v191, 7
    %v193 = vsub.s32 0, %v192
    %v194 = vrot.slane %v189, %v193
    %196 = vmatprep.subr.mxu0 0.0
    %197 = vmatpush1.msra.mxu0 %v173
    %198 = vmatprep.subr.mxu0 0.0
    %199 = vmatpush1.msra.mxu0 %v174
    %200 = vmatprep.subr.mxu0 0.0
    %201 = vmatpush1.msra.mxu0 %v175
    %202 = vmatprep.subr.mxu0 0.0
    %203 = vmatpush1.msra.mxu0 %v176
    %204 = vmatprep.subr.mxu0 0.0
    %205 = vmatpush1.msra.mxu0 %v177
    %206 = vmatprep.subr.mxu0 0.0
    %207 = vmatpush1.msra.mxu0 %v178
    %208 = vmatprep.subr.mxu0 0.0
    %209 = vmatpush1.msra.mxu0 %v179
    %210 = vmatprep.subr.mxu0 0.0
    %211 = vmatpush1.msra.mxu0 %v180
    %212 = vmatprep.subr.mxu0 0.0
    %213 = vmatpush1.msra.mxu0 %v181
    %214 = vmatprep.subr.mxu0 0.0
    %215 = vmatpush1.msra.mxu0 %v182
    %216 = vmatprep.subr.mxu0 0.0
    %217 = vmatpush1.msra.mxu0 %v183
    %218 = vmatprep.subr.mxu0 0.0
    %219 = vmatpush1.msra.mxu0 %v184
    %220 = vmatprep.subr.mxu0 0.0
    %221 = vmatpush1.msra.mxu0 %v185
    %222 = vmatprep.subr.mxu0 0.0
    %223 = vmatpush1.msra.mxu0 %v186
    %224 = vmatprep.subr.mxu0 0.0
    %225 = vmatpush1.msra.mxu0 %v187
    %226 = vmatprep.subr.mxu0 0.0
    %227 = vmatpush1.msra.mxu0 %v188
    %228 = vmatprep.subr.mxu0 0.0
    %229 = vmatpush1.msra.mxu0 0.0
    %230 = vmatprep.subr.mxu0 0.0
    %231 = vmatpush1.msra.mxu0 0.0
    %232 = vmatprep.subr.mxu0 0.0
    %233 = vmatpush1.msra.mxu0 0.0
    %234 = vmatprep.subr.mxu0 0.0
    %235 = vmatpush1.msra.mxu0 0.0
    %236 = vmatprep.subr.mxu0 0.0
    %237 = vmatpush1.msra.mxu0 0.0
    %238 = vmatprep.subr.mxu0 0.0
    %239 = vmatpush1.msra.mxu0 0.0
    %240 = vmatprep.subr.mxu0 0.0
    %241 = vmatpush1.msra.mxu0 0.0
    %242 = vmatprep.subr.mxu0 0.0
    %243 = vmatpush1.msra.mxu0 0.0
    %244 = vmatprep.subr.mxu0 0.0
    %245 = vmatpush1.msra.mxu0 0.0
    %246 = vmatprep.subr.mxu0 0.0
    %247 = vmatpush1.msra.mxu0 0.0
    %248 = vmatprep.subr.mxu0 0.0
    %249 = vmatpush1.msra.mxu0 0.0
    %250 = vmatprep.subr.mxu0 0.0
    %251 = vmatpush1.msra.mxu0 0.0
    %252 = vmatprep.subr.mxu0 0.0
    %253 = vmatpush1.msra.mxu0 0.0
    %254 = vmatprep.subr.mxu0 0.0
    %255 = vmatpush1.msra.mxu0 0.0
    %256 = vmatprep.subr.mxu0 0.0
    %257 = vmatpush1.msra.mxu0 0.0
    %258 = vmatprep.subr.mxu0 0.0
    %259 = vmatpush1.msra.mxu0 0.0
    %260 = vmatprep.mubr.f32.mxu0 0.0
    %261 = vmatmul.mubr.f32.gmra.mrb[0].mxu0 %v171
    %v262 = vpop.f32.mrb[0].mxu0
    %v263 = vadd.f32 %v194, %v262
    %v264 = vpop.f32.mrb[0].mxu0
    %265 = vmatprep.mubr.f32.mxu0 0.0
    %266 = vmatmul.mubr.f32.gmra.mrb[0].mxu0 %v172
    %v267 = vpop.f32.mrb[0].mxu0
    %v268 = vadd.f32 %v194, %v267
    %v269 = vpop.f32.mrb[0].mxu0
    %270 = vdwg.mxu0
    %271 = vst [vmem:[#allocation8] sm:$0xff] %v263
    %272 = vst [vmem:[#allocation8 + $0x8] sm:$0xff] %v268
    // Predicated region
    $region34: #{tpu_custom_call.1} parent=1 // pred_check
      _
    $region35: #{tpu_custom_call.1} parent=1 // pred_check_branch
      %274 = sbr.rel (0) target = $region37
    $region36: #{tpu_custom_call.1} parent=1 // pred_region
      %s276 = ssub.s32 256, 256
      %277 = vsyncadd [#allocation4], %s276
      %s278 = sshll.u32 [#allocation8], 4
      %s279 = int_to_ptr.vmem [resolvable:$true] %s278
      %284 = dma.vmem_to_hbm [thread:$0]  %s279, 256, %s5, [#allocation4], 128, 128, 8
    $region37: #{tpu_custom_call.1} parent=1 // pred_fallthru
      _
    // Predicated region
    $region38: #{tpu_custom_call.1} parent=1 // pred_check
      _
    $region39: #{tpu_custom_call.1} parent=1 // pred_check_branch
      %286 = sbr.rel (0) target = $region41
    $region40: #{tpu_custom_call.1} parent=1 // pred_region
      %287 = dma.done [#allocation4], 256
    $region41: #{tpu_custom_call.1} parent=1 // pred_fallthru
      _
    %288 = vsyncpa [#allocation3], 1
    %289 = vsyncpa [#allocation6], 1
    %290 = vsyncpa [#allocation4], 1

// kernel: tpu_custom_call.1
$region0: #{tpu_custom_call.1}
  #allocation0 [shape = 'u32[]', space=smem, size = 0x4, offset = 0x4, fixed_abs, tag = 'smem constant byte address 0x4 - core index']
  #allocation1 [shape = 'u32[144,128]{1,0:T(1,128)}', space=vmem, size = 0x12000, scoped, tag = 'internal scratch']
  %s0 = inlined_call_operand.hbm [shape: f32[16,128], index: 0, kind: input, shape index: {}]
  %s1 = inlined_call_operand.hbm [shape: f32[128,128], index: 1, kind: input, shape index: {}]
  %s2 = inlined_call_operand.hbm [shape: f32[1,128], index: 2, kind: input, shape index: {}]
  %s3 = inlined_call_operand.hbm [shape: f32[128,128], index: 3, kind: input, shape index: {}]
  %s4 = inlined_call_operand.hbm [shape: f32[1,128], index: 4, kind: input, shape index: {}]
  %s5 = inlined_call_operand.hbm [shape: f32[16,128], index: 5, kind: output, shape index: {}]
  %s6 = sld [smem:[#allocation0]]
  $region50: #{tpu_custom_call.1} parent=0
    _
  %s8 = ssub.s32 1, %s6
  %s9 = scalar_select 0, %s8, %s6
  $region1: #{tpu_custom_call.1} parent=0
    #allocation2 [shape = 'u8[8192]{0}', space=vmem, size = 0x2000, scoped, tag = 'input window, operand 0, single buffered']
    #allocation3 [shape = 's32[1]{0}', space=sflag, size = 0x4, scoped, tag = 'scoped memory for tpu_custom_call.1']
    #allocation4 [shape = 's32[1]{0}', space=sflag, size = 0x4, scoped, tag = 'scoped memory for tpu_custom_call.1']
    #allocation5 [shape = 'u8[65536]{0}', space=vmem, size = 0x10000, scoped, tag = 'input window, operand 1, single buffered']
    #allocation6 [shape = 's32[1]{0}', space=sflag, size = 0x4, scoped, tag = 'scoped memory for tpu_custom_call.1']
    #allocation7 [shape = 'u8[512]{0}', space=vmem, size = 0x400, scoped, tag = 'input window, operand 2, single buffered']
    #allocation8 [shape = 'u8[65536]{0}', space=vmem, size = 0x10000, scoped, tag = 'input window, operand 3, single buffered']
    #allocation9 [shape = 's32[1]{0}', space=sflag, size = 0x4, scoped, tag = 'scoped memory for tpu_custom_call.1']
    #allocation10 [shape = 'u8[512]{0}', space=vmem, size = 0x400, scoped, tag = 'input window, operand 4, single buffered']
    #allocation11 [shape = 'u8[8192]{0}', space=vmem, size = 0x2000, scoped, tag = 'output window, operand 0, single buffered']
    %10 = vsyncpa [#allocation3], 0
    %11 = vsyncpa [#allocation6], 0
    %12 = vsyncpa [#allocation9], 0
    %13 = vsyncpa [#allocation4], 0
    // Predicated region
    $region2: #{tpu_custom_call.1} parent=1 // pred_check
      _
    $region3: #{tpu_custom_call.1} parent=1 // pred_check_branch
      %15 = sbr.rel (0) target = $region5
    $region4: #{tpu_custom_call.1} parent=1 // pred_region
      %s17 = ssub.s32 256, 256
      %18 = vsyncadd [#allocation3], %s17
      %s19 = sshll.u32 [#allocation2], 4
      %s20 = int_to_ptr.vmem [resolvable:$true] %s19
      %25 = dma.hbm_to_vmem [thread:$0]  %s0, 256, %s20, [#allocation3], 128, 128, 8
    $region5: #{tpu_custom_call.1} parent=1 // pred_fallthru
      _
    // Predicated region
    $region6: #{tpu_custom_call.1} parent=1 // pred_check
      _
    $region7: #{tpu_custom_call.1} parent=1 // pred_check_branch
      %27 = sbr.rel (0) target = $region9
    $region8: #{tpu_custom_call.1} parent=1 // pred_region
      %s29 = ssub.s32 2048, 2048
      %30 = vsyncadd [#allocation6], %s29
      %s31 = sshll.u32 [#allocation5], 4
      %s32 = int_to_ptr.vmem [resolvable:$true] %s31
      %37 = dma.hbm_to_vmem [thread:$0]  %s1, 2048, %s32, [#allocation6], 128, 128, 8
    $region9: #{tpu_custom_call.1} parent=1 // pred_fallthru
      _
    // Predicated region
    $region10: #{tpu_custom_call.1} parent=1 // pred_check
      _
    $region11: #{tpu_custom_call.1} parent=1 // pred_check_branch
      %39 = sbr.rel (0) target = $region13
    $region12: #{tpu_custom_call.1} parent=1 // pred_region
      %s41 = ssub.s32 16, 16
      %42 = vsyncadd [#allocation6], %s41
      %s44 = sshll.u32 [#allocation7], 4
      %s45 = int_to_ptr.vmem [resolvable:$true] %s44
      %47 = dma.hbm_to_vmem [thread:$0]  %s2, 16, %s45, [#allocation6]
    $region13: #{tpu_custom_call.1} parent=1 // pred_fallthru
      _
    // Predicated region
    $region14: #{tpu_custom_call.1} parent=1 // pred_check
      _
    $region15: #{tpu_custom_call.1} parent=1 // pred_check_branch
      %49 = sbr.rel (0) target = $region17
    $region16: #{tpu_custom_call.1} parent=1 // pred_region
      %s51 = ssub.s32 2048, 2048
      %52 = vsyncadd [#allocation9], %s51
      %s53 = sshll.u32 [#allocation8], 4
      %s54 = int_to_ptr.vmem [resolvable:$true] %s53
      %59 = dma.hbm_to_vmem [thread:$0]  %s3, 2048, %s54, [#allocation9], 128, 128, 8
    $region17: #{tpu_custom_call.1} parent=1 // pred_fallthru
      _
    // Predicated region
    $region18: #{tpu_custom_call.1} parent=1 // pred_check
      _
    $region19: #{tpu_custom_call.1} parent=1 // pred_check_branch
      %61 = sbr.rel (0) target = $region21
    $region20: #{tpu_custom_call.1} parent=1 // pred_region
      %s63 = ssub.s32 16, 16
      %64 = vsyncadd [#allocation9], %s63
      %s66 = sshll.u32 [#allocation10], 4
      %s67 = int_to_ptr.vmem [resolvable:$true] %s66
      %69 = dma.hbm_to_vmem [thread:$0]  %s4, 16, %s67, [#allocation9]
    $region21: #{tpu_custom_call.1} parent=1 // pred_fallthru
      _
    // Predicated region
    $region22: #{tpu_custom_call.1} parent=1 // pred_check
      _
    $region23: #{tpu_custom_call.1} parent=1 // pred_check_branch
      %71 = sbr.rel (0) target = $region25
    $region24: #{tpu_custom_call.1} parent=1 // pred_region
      %72 = dma.done [#allocation3], 256
    $region25: #{tpu_custom_call.1} parent=1 // pred_fallthru
      _
    // Predicated region
    $region26: #{tpu_custom_call.1} parent=1 // pred_check
      _
    $region27: #{tpu_custom_call.1} parent=1 // pred_check_branch
      %74 = sbr.rel (0) target = $region29
    $region28: #{tpu_custom_call.1} parent=1 // pred_region
      %75 = dma.done [#allocation6], 2048
    $region29: #{tpu_custom_call.1} parent=1 // pred_fallthru
      _
    // Predicated region
    $region30: #{tpu_custom_call.1} parent=1 // pred_check
      _
    $region31: #{tpu_custom_call.1} parent=1 // pred_check_branch
      %77 = sbr.rel (0) target = $region33
    $region32: #{tpu_custom_call.1} parent=1 // pred_region
      %78 = dma.done [#allocation6], 16
    $region33: #{tpu_custom_call.1} parent=1 // pred_fallthru
      _
    // Predicated region
    $region34: #{tpu_custom_call.1} parent=1 // pred_check
      _
    $region35: #{tpu_custom_call.1} parent=1 // pred_check_branch
      %80 = sbr.rel (0) target = $region37
    $region36: #{tpu_custom_call.1} parent=1 // pred_region
      %81 = dma.done [#allocation9], 2048
    $region37: #{tpu_custom_call.1} parent=1 // pred_fallthru
      _
    // Predicated region
    $region38: #{tpu_custom_call.1} parent=1 // pred_check
      _
    $region39: #{tpu_custom_call.1} parent=1 // pred_check_branch
      %83 = sbr.rel (0) target = $region41
    $region40: #{tpu_custom_call.1} parent=1 // pred_region
      %84 = dma.done [#allocation9], 16
    $region41: #{tpu_custom_call.1} parent=1 // pred_fallthru
      _
    %v85 = vld [vmem:[#allocation2] sm:$0xff]
    %v86 = vld [vmem:[#allocation2 + $0x8] sm:$0xff]
    %v87 = vld [vmem:[#allocation5] sm:$0xff]
    %v88 = vld [vmem:[#allocation5 + $0x8] sm:$0xff]
    %v89 = vld [vmem:[#allocation5 + $0x10] sm:$0xff]
    %v90 = vld [vmem:[#allocation5 + $0x18] sm:$0xff]
    %v91 = vld [vmem:[#allocation5 + $0x20] sm:$0xff]
    %v92 = vld [vmem:[#allocation5 + $0x28] sm:$0xff]
    %v93 = vld [vmem:[#allocation5 + $0x30] sm:$0xff]
    %v94 = vld [vmem:[#allocation5 + $0x38] sm:$0xff]
    %v95 = vld [vmem:[#allocation5 + $0x40] sm:$0xff]
    %v96 = vld [vmem:[#allocation5 + $0x48] sm:$0xff]
    %v97 = vld [vmem:[#allocation5 + $0x50] sm:$0xff]
    %v98 = vld [vmem:[#allocation5 + $0x58] sm:$0xff]
    %v99 = vld [vmem:[#allocation5 + $0x60] sm:$0xff]
    %v100 = vld [vmem:[#allocation5 + $0x68] sm:$0xff]
    %v101 = vld [vmem:[#allocation5 + $0x70] sm:$0xff]
    %v102 = vld [vmem:[#allocation5 + $0x78] sm:$0xff]
    %v103 = vld [vmem:[#allocation7] sm:$0x1]
    %v105 = vlaneseq
    %v106 = vshrl.u32 %v105, 7
    %v107 = vsub.s32 0, %v106
    %v108 = vrot.slane %v103, %v107
    %110 = vmatprep.subr.mxu0 0.0
    %111 = vmatpush1.msra.mxu0 %v87
    %112 = vmatprep.subr.mxu0 0.0
    %113 = vmatpush1.msra.mxu0 %v88
    %114 = vmatprep.subr.mxu0 0.0
    %115 = vmatpush1.msra.mxu0 %v89
    %116 = vmatprep.subr.mxu0 0.0
    %117 = vmatpush1.msra.mxu0 %v90
    %118 = vmatprep.subr.mxu0 0.0
    %119 = vmatpush1.msra.mxu0 %v91
    %120 = vmatprep.subr.mxu0 0.0
    %121 = vmatpush1.msra.mxu0 %v92
    %122 = vmatprep.subr.mxu0 0.0
    %123 = vmatpush1.msra.mxu0 %v93
    %124 = vmatprep.subr.mxu0 0.0
    %125 = vmatpush1.msra.mxu0 %v94
    %126 = vmatprep.subr.mxu0 0.0
    %127 = vmatpush1.msra.mxu0 %v95
    %128 = vmatprep.subr.mxu0 0.0
    %129 = vmatpush1.msra.mxu0 %v96
    %130 = vmatprep.subr.mxu0 0.0
    %131 = vmatpush1.msra.mxu0 %v97
    %132 = vmatprep.subr.mxu0 0.0
    %133 = vmatpush1.msra.mxu0 %v98
    %134 = vmatprep.subr.mxu0 0.0
    %135 = vmatpush1.msra.mxu0 %v99
    %136 = vmatprep.subr.mxu0 0.0
    %137 = vmatpush1.msra.mxu0 %v100
    %138 = vmatprep.subr.mxu0 0.0
    %139 = vmatpush1.msra.mxu0 %v101
    %140 = vmatprep.subr.mxu0 0.0
    %141 = vmatpush1.msra.mxu0 %v102
    %142 = vmatprep.subr.mxu0 0.0
    %143 = vmatpush1.msra.mxu0 0.0
    %144 = vmatprep.subr.mxu0 0.0
    %145 = vmatpush1.msra.mxu0 0.0
    %146 = vmatprep.subr.mxu0 0.0
    %147 = vmatpush1.msra.mxu0 0.0
    %148 = vmatprep.subr.mxu0 0.0
    %149 = vmatpush1.msra.mxu0 0.0
    %150 = vmatprep.subr.mxu0 0.0
    %151 = vmatpush1.msra.mxu0 0.0
    %152 = vmatprep.subr.mxu0 0.0
    %153 = vmatpush1.msra.mxu0 0.0
    %154 = vmatprep.subr.mxu0 0.0
    %155 = vmatpush1.msra.mxu0 0.0
    %156 = vmatprep.subr.mxu0 0.0
    %157 = vmatpush1.msra.mxu0 0.0
    %158 = vmatprep.subr.mxu0 0.0
    %159 = vmatpush1.msra.mxu0 0.0
    %160 = vmatprep.subr.mxu0 0.0
    %161 = vmatpush1.msra.mxu0 0.0
    %162 = vmatprep.subr.mxu0 0.0
    %163 = vmatpush1.msra.mxu0 0.0
    %164 = vmatprep.subr.mxu0 0.0
    %165 = vmatpush1.msra.mxu0 0.0
    %166 = vmatprep.subr.mxu0 0.0
    %167 = vmatpush1.msra.mxu0 0.0
    %168 = vmatprep.subr.mxu0 0.0
    %169 = vmatpush1.msra.mxu0 0.0
    %170 = vmatprep.subr.mxu0 0.0
    %171 = vmatpush1.msra.mxu0 0.0
    %172 = vmatprep.subr.mxu0 0.0
    %173 = vmatpush1.msra.mxu0 0.0
    %174 = vmatprep.mubr.f32.mxu0 0.0
    %175 = vmatmul.mubr.f32.gmra.mrb[0].mxu0 %v85
    %v176 = vpop.f32.mrb[0].mxu0
    %v177 = vadd.f32 %v108, %v176
    %v178 = vpop.f32.mrb[0].mxu0
    %179 = vmatprep.mubr.f32.mxu0 0.0
    %180 = vmatmul.mubr.f32.gmra.mrb[0].mxu0 %v86
    %v181 = vpop.f32.mrb[0].mxu0
    %v182 = vadd.f32 %v108, %v181
    %v183 = vpop.f32.mrb[0].mxu0
    %184 = vdwg.mxu0
    %v185 = vmul.f32 %v177, 0.5
    %v186 = vmul.f32 %v182, 0.5
    %v187 = vrcp.pop 1.4142135
    %v188 = vmul.f32 %v177, %v187
    %v189 = vmul.f32 %v182, %v187
    %v190 = verf.f32.pop %v188
    %v191 = verf.f32.pop %v189
    %v192 = vadd.f32 %v190, 1.0
    %v193 = vadd.f32 %v191, 1.0
    %v194 = vmul.f32 %v185, %v192
    %v195 = vmul.f32 %v186, %v193
    %v196 = vld [vmem:[#allocation8] sm:$0xff]
    %v197 = vld [vmem:[#allocation8 + $0x8] sm:$0xff]
    %v198 = vld [vmem:[#allocation8 + $0x10] sm:$0xff]
    %v199 = vld [vmem:[#allocation8 + $0x18] sm:$0xff]
    %v200 = vld [vmem:[#allocation8 + $0x20] sm:$0xff]
    %v201 = vld [vmem:[#allocation8 + $0x28] sm:$0xff]
    %v202 = vld [vmem:[#allocation8 + $0x30] sm:$0xff]
    %v203 = vld [vmem:[#allocation8 + $0x38] sm:$0xff]
    %v204 = vld [vmem:[#allocation8 + $0x40] sm:$0xff]
    %v205 = vld [vmem:[#allocation8 + $0x48] sm:$0xff]
    %v206 = vld [vmem:[#allocation8 + $0x50] sm:$0xff]
    %v207 = vld [vmem:[#allocation8 + $0x58] sm:$0xff]
    %v208 = vld [vmem:[#allocation8 + $0x60] sm:$0xff]
    %v209 = vld [vmem:[#allocation8 + $0x68] sm:$0xff]
    %v210 = vld [vmem:[#allocation8 + $0x70] sm:$0xff]
    %v211 = vld [vmem:[#allocation8 + $0x78] sm:$0xff]
    %v212 = vld [vmem:[#allocation10] sm:$0x1]
    %v214 = vlaneseq
    %v215 = vshrl.u32 %v214, 7
    %v216 = vsub.s32 0, %v215
    %v217 = vrot.slane %v212, %v216
    %219 = vmatprep.subr.mxu0 0.0
    %220 = vmatpush1.msra.mxu0 %v196
    %221 = vmatprep.subr.mxu0 0.0
    %222 = vmatpush1.msra.mxu0 %v197
    %223 = vmatprep.subr.mxu0 0.0
    %224 = vmatpush1.msra.mxu0 %v198
    %225 = vmatprep.subr.mxu0 0.0
    %226 = vmatpush1.msra.mxu0 %v199
    %227 = vmatprep.subr.mxu0 0.0
    %228 = vmatpush1.msra.mxu0 %v200
    %229 = vmatprep.subr.mxu0 0.0
    %230 = vmatpush1.msra.mxu0 %v201
    %231 = vmatprep.subr.mxu0 0.0
    %232 = vmatpush1.msra.mxu0 %v202
    %233 = vmatprep.subr.mxu0 0.0
    %234 = vmatpush1.msra.mxu0 %v203
    %235 = vmatprep.subr.mxu0 0.0
    %236 = vmatpush1.msra.mxu0 %v204
    %237 = vmatprep.subr.mxu0 0.0
    %238 = vmatpush1.msra.mxu0 %v205
    %239 = vmatprep.subr.mxu0 0.0
    %240 = vmatpush1.msra.mxu0 %v206
    %241 = vmatprep.subr.mxu0 0.0
    %242 = vmatpush1.msra.mxu0 %v207
    %243 = vmatprep.subr.mxu0 0.0
    %244 = vmatpush1.msra.mxu0 %v208
    %245 = vmatprep.subr.mxu0 0.0
    %246 = vmatpush1.msra.mxu0 %v209
    %247 = vmatprep.subr.mxu0 0.0
    %248 = vmatpush1.msra.mxu0 %v210
    %249 = vmatprep.subr.mxu0 0.0
    %250 = vmatpush1.msra.mxu0 %v211
    %251 = vmatprep.subr.mxu0 0.0
    %252 = vmatpush1.msra.mxu0 0.0
    %253 = vmatprep.subr.mxu0 0.0
    %254 = vmatpush1.msra.mxu0 0.0
    %255 = vmatprep.subr.mxu0 0.0
    %256 = vmatpush1.msra.mxu0 0.0
    %257 = vmatprep.subr.mxu0 0.0
    %258 = vmatpush1.msra.mxu0 0.0
    %259 = vmatprep.subr.mxu0 0.0
    %260 = vmatpush1.msra.mxu0 0.0
    %261 = vmatprep.subr.mxu0 0.0
    %262 = vmatpush1.msra.mxu0 0.0
    %263 = vmatprep.subr.mxu0 0.0
    %264 = vmatpush1.msra.mxu0 0.0
    %265 = vmatprep.subr.mxu0 0.0
    %266 = vmatpush1.msra.mxu0 0.0
    %267 = vmatprep.subr.mxu0 0.0
    %268 = vmatpush1.msra.mxu0 0.0
    %269 = vmatprep.subr.mxu0 0.0
    %270 = vmatpush1.msra.mxu0 0.0
    %271 = vmatprep.subr.mxu0 0.0
    %272 = vmatpush1.msra.mxu0 0.0
    %273 = vmatprep.subr.mxu0 0.0
    %274 = vmatpush1.msra.mxu0 0.0
    %275 = vmatprep.subr.mxu0 0.0
    %276 = vmatpush1.msra.mxu0 0.0
    %277 = vmatprep.subr.mxu0 0.0
    %278 = vmatpush1.msra.mxu0 0.0
    %279 = vmatprep.subr.mxu0 0.0
    %280 = vmatpush1.msra.mxu0 0.0
    %281 = vmatprep.subr.mxu0 0.0
    %282 = vmatpush1.msra.mxu0 0.0
    %283 = vmatprep.mubr.f32.mxu0 0.0
    %284 = vmatmul.mubr.f32.gmra.mrb[0].mxu0 %v194
    %v285 = vpop.f32.mrb[0].mxu0
    %v286 = vadd.f32 %v217, %v285
    %v287 = vpop.f32.mrb[0].mxu0
    %288 = vmatprep.mubr.f32.mxu0 0.0
    %289 = vmatmul.mubr.f32.gmra.mrb[0].mxu0 %v195
    %v290 = vpop.f32.mrb[0].mxu0
    %v291 = vadd.f32 %v217, %v290
    %v292 = vpop.f32.mrb[0].mxu0
    %293 = vdwg.mxu0
    %294 = vst [vmem:[#allocation11] sm:$0xff] %v286
    %295 = vst [vmem:[#allocation11 + $0x8] sm:$0xff] %v291
    // Predicated region
    $region42: #{tpu_custom_call.1} parent=1 // pred_check
      _
    $region43: #{tpu_custom_call.1} parent=1 // pred_check_branch
      %297 = sbr.rel (0) target = $region45
    $region44: #{tpu_custom_call.1} parent=1 // pred_region
      %s299 = ssub.s32 256, 256
      %300 = vsyncadd [#allocation4], %s299
      %s301 = sshll.u32 [#allocation11], 4
      %s302 = int_to_ptr.vmem [resolvable:$true] %s301
      %307 = dma.vmem_to_hbm [thread:$0]  %s302, 256, %s5, [#allocation4], 128, 128, 8
    $region45: #{tpu_custom_call.1} parent=1 // pred_fallthru
      _
    // Predicated region
    $region46: #{tpu_custom_call.1} parent=1 // pred_check
      _
    $region47: #{tpu_custom_call.1} parent=1 // pred_check_branch
      %309 = sbr.rel (0) target = $region49
    $region48: #{tpu_custom_call.1} parent=1 // pred_region
      %310 = dma.done [#allocation4], 256
    $region49: #{tpu_custom_call.1} parent=1 // pred_fallthru
      _
    %311 = vsyncpa [#allocation3], 1
    %312 = vsyncpa [#allocation6], 1
    %313 = vsyncpa [#allocation9], 1
    %314 = vsyncpa [#allocation4], 1

</llo_original>
